<compile_context>
chip_gen: v7x
topology: tpu7x:2x2x1
jax: 0.10.0
libtpu: 0.0.40
codegen_flags: <defaults>
</compile_context>

<pallas_src>
import jax
import jax.numpy as jnp
from jax.experimental import pallas as pl
from jax.experimental.pallas import tpu as pltpu


def _layer_centralization_kernel(x_ref, b_ref, o_ref):
    # x_ref: (TB, N) where N = S*H; b_ref: (1, N) pre-broadcast bias; o_ref: (TB, N).
    x = x_ref[...].astype(jnp.float32)
    n = x.shape[-1]
    # Fused per-row mean over the last two original axes (S, H). Rows have uniform
    # length, so a single lane+sublane reduce * 1/N equals mean(-1).mean(-2)
    # (same math; only fp rounding order differs slightly).
    m = jnp.sum(x, axis=-1, keepdims=True) * (1.0 / n)          # (TB, 1)
    o_ref[...] = (x - m + b_ref[...].astype(jnp.float32)).astype(o_ref.dtype)


def layer_centralization(x, bias, *, target_block_bytes=12 * 1024 * 1024):
    """x: (B, S, H), bias: (H,) -> (B, S, H). Matches LayerCentralization.forward."""
    B, S, H = x.shape
    N = S * H
    itemsize = jnp.dtype(x.dtype).itemsize

    # Lane-dense layout: one flattened row per batch element.
    x2 = x.reshape(B, N)
    # Bias broadcasts over S, so its flattened-row form is `bias` tiled S times.
    bias_row = jnp.tile(bias.astype(x.dtype), S).reshape(1, N)

    # Pick TB (batch rows per block): as large as fits the block budget.
    # ~12 MiB/block -> ~50 MiB double-buffered in+out, safe on v7x (64 MiB VMEM)
    # while still being well into "big block" territory (>=~1 MiB blocks reach
    # ~85% of the HBM roofline on v6e).
    per_row_bytes = N * itemsize
    max_tb = max(1, target_block_bytes // per_row_bytes)
    if max_tb >= B:
        TB = B                               # whole batch in one block
    else:
        TB = max(8, (max_tb // 8) * 8)       # keep (8,*) sublane tiling when sub-batching
        TB = min(TB, B)
    num_blocks = pl.cdiv(B, TB)
    # TODO(synk): for very large S*H (a single batch row > ~12 MiB) switch to a
    # two-pass S-tiled scheme (pass 1: per-batch sums; pass 2: elementwise x-m+b over
    # grid=(B, S//tS)) so v7x's 64 MiB VMEM is respected and both TensorCores get work.

    block_bytes = TB * N * itemsize
    vmem_limit = int(min(128 * 1024 * 1024,
                         max(32 * 1024 * 1024,
                             4 * block_bytes + 2 * N * itemsize + (1 << 20))))

    out2 = pl.pallas_call(
        _layer_centralization_kernel,
        out_shape=jax.ShapeDtypeStruct((B, N), x.dtype),
        grid=(num_blocks,),
        in_specs=[
            pl.BlockSpec((TB, N), lambda b: (b, 0)),
            pl.BlockSpec((1, N), lambda b: (0, 0)),
        ],
        out_specs=pl.BlockSpec((TB, N), lambda b: (b, 0)),
        compiler_params=pltpu.CompilerParams(
            dimension_semantics=("parallel",),
            vmem_limit_bytes=vmem_limit,
        ),
    )(x2, bias_row)
    return out2.reshape(B, S, H)


if __name__ == "__main__":
    key = jax.random.PRNGKey(0)
    B, S, H = 2, 8, 32                      # small shapes: batch=2, seq=8, hidden=32
    x = jax.random.normal(key, (B, S, H), dtype=jnp.float32)
    # Module __init__ / reset_parameters(): bias is zero-initialized.
    bias = jnp.zeros((H,), dtype=jnp.float32)

    out = jax.block_until_ready(layer_centralization(x, bias))

    # Pure-JAX reference with the PyTorch axis/broadcast semantics.
    ref = x - x.mean(axis=-1, keepdims=True).mean(axis=-2, keepdims=True) + bias
    assert out.shape == (B, S, H) and out.dtype == jnp.float32
    assert jnp.allclose(out, ref, atol=1e-5), "Pallas output mismatch vs reference"

    print("KERNEL_OK")
</pallas_src>

<mosaic_0001>
module attributes {stable_mosaic.version = 11 : i64} {
  func.func @_layer_centralization_kernel(%arg0: i32, %arg1: memref<2x256xf32, #tpu.memory_space<vmem>>, %arg2: memref<1x256xf32, #tpu.memory_space<vmem>>, %arg3: memref<2x256xf32, #tpu.memory_space<vmem>>) attributes {dimension_semantics = [#tpu.dimension_semantics<parallel>], iteration_bounds = array<i64: 1>, scalar_prefetch = 0 : i64, scratch_operands = 0 : i64, tpu.core_type = #tpu.core_type<tc>, window_params = [{transform_indices = @transform_0, window_bounds = array<i64: 2, 256>}, {pipeline_mode = #tpu.pipeline_mode<synchronous>, transform_indices = @transform_1, window_bounds = array<i64: 1, 256>}, {transform_indices = @transform_2, window_bounds = array<i64: 2, 256>}]} {
    %c0 = arith.constant 0 : index
    %c0_0 = arith.constant 0 : index
    %0 = vector.load %arg1[%c0, %c0_0] : memref<2x256xf32, #tpu.memory_space<vmem>>, vector<2x256xf32>
    %cst = arith.constant dense<0.000000e+00> : vector<2xf32>
    %1 = vector.multi_reduction <add>, %0, %cst [1] : vector<2x256xf32> to vector<2xf32>
    %2 = vector.shape_cast %1 : vector<2xf32> to vector<2x1xf32>
    %cst_1 = arith.constant 3.906250e-03 : f32
    %3 = vector.broadcast %cst_1 : f32 to vector<2x1xf32>
    %4 = arith.mulf %2, %3 : vector<2x1xf32>
    %5 = vector.broadcast %4 : vector<2x1xf32> to vector<2x256xf32>
    %6 = arith.subf %0, %5 : vector<2x256xf32>
    %c0_2 = arith.constant 0 : index
    %c0_3 = arith.constant 0 : index
    %7 = vector.load %arg2[%c0_2, %c0_3] : memref<1x256xf32, #tpu.memory_space<vmem>>, vector<1x256xf32>
    %8 = vector.broadcast %7 : vector<1x256xf32> to vector<2x256xf32>
    %9 = arith.addf %6, %8 : vector<2x256xf32>
    %c0_4 = arith.constant 0 : index
    %c0_5 = arith.constant 0 : index
    %10 = vector.load %arg3[%c0_4, %c0_5] : memref<2x256xf32, #tpu.memory_space<vmem>>, vector<2x256xf32>
    tpu.vector_store %arg3[%c0_4, %c0_5], %9 {strides = array<i32>} : memref<2x256xf32, #tpu.memory_space<vmem>>, vector<2x256xf32>,
    return
  }
  func.func @transform_0(%arg0: i32) -> (i32, i32) {
    %c0_i32 = arith.constant 0 : i32
    %c0_i32_0 = arith.constant 0 : i32
    return %arg0, %c0_i32 : i32, i32
  }
  func.func @transform_1(%arg0: i32) -> (i32, i32) {
    %c0_i32 = arith.constant 0 : i32
    %c0_i32_0 = arith.constant 0 : i32
    %c0_i32_1 = arith.constant 0 : i32
    return %c0_i32, %c0_i32_0 : i32, i32
  }
  func.func @transform_2(%arg0: i32) -> (i32, i32) {
    %c0_i32 = arith.constant 0 : i32
    %c0_i32_0 = arith.constant 0 : i32
    return %arg0, %c0_i32 : i32, i32
  }
}

</mosaic_0001>

<llo_original>
// kernel: tpu_custom_call.1
$region0: #{tpu_custom_call.1}
  #allocation0 [shape = 'u32[]', space=smem, size = 0x4, offset = 0x4, fixed_abs, tag = 'smem constant byte address 0x4 - core index']
  #allocation1 [shape = 'u32[144,128]{1,0:T(1,128)}', space=vmem, size = 0x12000, scoped, tag = 'internal scratch']
  %s0 = inlined_call_operand.hbm [shape: f32[2,256], index: 0, kind: input, shape index: {}]
  %s1 = inlined_call_operand.vmem [shape: f32[1,256], index: 1, kind: input, shape index: {}]
  %s2 = inlined_call_operand.hbm [shape: f32[2,256], index: 2, kind: output, shape index: {}]
  %s3 = sld [smem:[#allocation0]]
  $region22: #{tpu_custom_call.1} parent=0
    _
  %s5 = ssub.s32 1, %s3
  %s6 = scalar_select 0, %s5, %s3
  $region1: #{tpu_custom_call.1} parent=0
    #allocation2 [shape = 'u8[2048]{0}', space=vmem, size = 0x800, scoped, tag = 'input window, operand 0, single buffered']
    #allocation3 [shape = 's32[1]{0}', space=sflag, size = 0x4, scoped, tag = 'scoped memory for tpu_custom_call.1']
    #allocation4 [shape = 's32[1]{0}', space=sflag, size = 0x4, scoped, tag = 'scoped memory for tpu_custom_call.1']
    #allocation5 [shape = 'u8[2048]{0}', space=vmem, size = 0x800, scoped, tag = 'output window, operand 0, single buffered']
    %7 = vsyncpa [#allocation3], 0
    %8 = vsyncpa [#allocation4], 0
    // Predicated region
    $region2: #{tpu_custom_call.1} parent=1 // pred_check
      _
    $region3: #{tpu_custom_call.1} parent=1 // pred_check_branch
      %10 = sbr.rel (0) target = $region5
    $region4: #{tpu_custom_call.1} parent=1 // pred_region
      %s12 = ssub.s32 64, 64
      %13 = vsyncadd [#allocation3], %s12
      %s15 = sshll.u32 [#allocation2], 4
      %s16 = int_to_ptr.vmem [resolvable:$true] %s15
      %18 = dma.hbm_to_vmem [thread:$0]  %s0, 64, %s16, [#allocation3]
    $region5: #{tpu_custom_call.1} parent=1 // pred_fallthru
      _
    // Predicated region
    $region6: #{tpu_custom_call.1} parent=1 // pred_check
      _
    $region7: #{tpu_custom_call.1} parent=1 // pred_check_branch
      %20 = sbr.rel (0) target = $region9
    $region8: #{tpu_custom_call.1} parent=1 // pred_region
      _
    $region9: #{tpu_custom_call.1} parent=1 // pred_fallthru
      _
    // Predicated region
    $region10: #{tpu_custom_call.1} parent=1 // pred_check
      _
    $region11: #{tpu_custom_call.1} parent=1 // pred_check_branch
      %22 = sbr.rel (0) target = $region13
    $region12: #{tpu_custom_call.1} parent=1 // pred_region
      %23 = dma.done [#allocation3], 64
    $region13: #{tpu_custom_call.1} parent=1 // pred_fallthru
      _
    %v24 = vld [vmem:[#allocation2] sm:$0xf]
    %v27 = vunpack.c.l.s4 1983009808
    %v28 = vunpack.c.0.s8 %v27
    %v29 = vlaneseq
    %v30 = vshrl.u32 %v29, 7
    %v31 = vsub.s32 %v28, %v30
    %v32 = vrot.slane %v24, %v31
    %v33 = vcombine.high %v32, %v32
    %vm36 = vcmask 1041408
    %v37 = vsel %vm36, %v32, 0.0
    %v38 = vsel %vm36, %v33, 0.0
    %v39 = vadd.f32 %v37, %v38
    %40 = vadd.xlane.f32.xlu0 %v39
    %v41 = vpop.xlane.xlu0 %40
    %v42 = vmul.f32 %v41, 0.00390625
    %v45 = vunpack.c.l.s4 269488144
    %v46 = vunpack.c.0.s8 %v45
    %v47 = vlaneseq
    %v48 = vshrl.u32 %v47, 7
    %v49 = vsub.s32 %v46, %v48
    %v50 = vrot.slane %v42, %v49
    %v52 = vsub.f32 %v24, %v50
    %v53 = vld [vmem:[%s1] sm:$0x3]
    %v55 = vlaneseq
    %v56 = vshrl.u32 %v55, 7
    %v57 = vsub.s32 0, %v56
    %v58 = vrot.slane %v53, %v57
    %v59 = vlaneseq
    %v60 = vshrl.u32 %v59, 7
    %v61 = vsub.s32 1, %v60
    %v62 = vrot.slane %v53, %v61
    %v63 = vcombine.low %v58, %v62
    %v65 = vunpack.c.l.s4 1983009808
    %v66 = vunpack.c.0.s8 %v65
    %v67 = vlaneseq
    %v68 = vshrl.u32 %v67, 7
    %v69 = vsub.s32 %v66, %v68
    %v70 = vrot.slane %v63, %v69
    %v72 = vadd.f32 %v52, %v70
    %73 = vst [vmem:[#allocation5] sm:$0xf] %v72
    // Predicated region
    $region14: #{tpu_custom_call.1} parent=1 // pred_check
      _
    $region15: #{tpu_custom_call.1} parent=1 // pred_check_branch
      %75 = sbr.rel (0) target = $region17
    $region16: #{tpu_custom_call.1} parent=1 // pred_region
      %s77 = ssub.s32 64, 64
      %78 = vsyncadd [#allocation4], %s77
      %s80 = sshll.u32 [#allocation5], 4
      %s81 = int_to_ptr.vmem [resolvable:$true] %s80
      %83 = dma.vmem_to_hbm [thread:$0]  %s81, 64, %s2, [#allocation4]
    $region17: #{tpu_custom_call.1} parent=1 // pred_fallthru
      _
    // Predicated region
    $region18: #{tpu_custom_call.1} parent=1 // pred_check
      _
    $region19: #{tpu_custom_call.1} parent=1 // pred_check_branch
      %85 = sbr.rel (0) target = $region21
    $region20: #{tpu_custom_call.1} parent=1 // pred_region
      %86 = dma.done [#allocation4], 64
    $region21: #{tpu_custom_call.1} parent=1 // pred_fallthru
      _
    %87 = vsyncpa [#allocation3], 1
    %88 = vsyncpa [#allocation4], 1

</llo_original>
